<compile_context>
chip_gen: v7x
topology: tpu7x:2x2x1
jax: 0.10.0
libtpu: 0.0.40
codegen_flags: <defaults>
</compile_context>

<pallas_src>
import math

import numpy as np
import jax
import jax.numpy as jnp
from jax import lax
from jax.experimental import pallas as pl
from jax.experimental.pallas import tpu as pltpu


# ----------------------------------------------------------------------------
# Static interpolation matrices (built host-side in NumPy).
# ----------------------------------------------------------------------------
def _interp_matrix_np(out_size: int, in_size: int) -> np.ndarray:
    """(out_size, in_size) bilinear interpolation matrix, align_corners=True."""
    if out_size == 1:
        # Degenerate 1-pixel output: PyTorch uses scale 0 -> sample row 0.
        src = np.zeros((1,), np.float64)
    else:
        src = np.arange(out_size, dtype=np.float64) * (in_size - 1) / (out_size - 1)
    i0 = np.clip(np.floor(src).astype(np.int64), 0, in_size - 1)
    i1 = np.minimum(i0 + 1, in_size - 1)
    w1 = (src - i0).astype(np.float32)
    w0 = (1.0 - w1).astype(np.float32)
    mat = np.zeros((out_size, in_size), np.float32)
    rows = np.arange(out_size)
    mat[rows, i0] += w0
    mat[rows, i1] += w1          # i0 == i1 at the clamp -> weights still sum to 1
    return mat


# ----------------------------------------------------------------------------
# Sizing helpers.
# ----------------------------------------------------------------------------
def _round_up(v: int, m: int) -> int:
    return -(-v // m) * m


def _padded_spatial_elems(h: int, w: int) -> int:
    # VMEM tiles pad the (sublane, lane) dims to (8, 128).
    return _round_up(max(h, 1), 8) * _round_up(max(w, 1), 128)


def _vmem_capacity_bytes() -> int:
    """Physical VMEM per TensorCore (generation-aware); conservative fallback."""
    try:
        info = pltpu.get_tpu_info()
        cap = getattr(info, "vmem_capacity_bytes", None)
        if cap:
            return int(cap)
    except Exception:
        pass
    return 64 << 20  # conservative (v7x-sized) default


def _vmem_budget():
    """(tile budget for double-buffered blocks, vmem_limit_bytes for Mosaic)."""
    cap = _vmem_capacity_bytes()
    budget = cap // 3                                  # ~43 MiB on 128 MiB, ~21 MiB on 64 MiB
    limit = min((cap * 3) // 4, budget + (16 << 20))   # headroom, but below physical
    limit = max(limit, budget + (4 << 20))
    return budget, int(limit)


def _pick_subchunk(C, H, W, Hs, Ws, vreg_budget_bytes=128 << 10):
    """Channels per in-kernel sub-chunk so f32 intermediates stay near the vreg file."""
    per_c = 4 * (H * _round_up(W, 128)        # xb (worst case f32)
                 + H * _round_up(Ws, 128)     # t1
                 + Hs * _round_up(Ws, 128))   # o
    c = max(1, vreg_budget_bytes // max(per_c, 1))
    p = 1
    while p * 2 <= min(c, 32):                # power of two, capped
        p *= 2
    return max(1, min(p, C))


def _pick_channel_tile(C, H, W, Hs, Ws, in_itemsize, out_itemsize, budget_bytes, chunk):
    """Largest channel tile (multiple of `chunk`) whose double-buffered blocks fit."""
    per_c = 2 * (_padded_spatial_elems(H, W) * in_itemsize
                 + _padded_spatial_elems(Hs, Ws) * out_itemsize)
    cap = max(1, budget_bytes // max(per_c, 1))
    c_pad = _round_up(C, chunk)
    if cap >= c_pad:
        return c_pad
    return max(chunk, (cap // chunk) * chunk)


# ----------------------------------------------------------------------------
# Kernel: separable bilinear resize of one (channel-tile, H, W) block.
# ----------------------------------------------------------------------------
def _make_resize_kernel(chunk: int, n_sub: int):
    unroll = n_sub <= 8

    def kernel(x_ref, ah_ref, awT_ref, out_ref):
        # x_ref: (TC, H, W) in native dtype (bf16 stays MXU-native),
        # ah_ref: (Hs, H) f32, awT_ref: (W, Ws) x.dtype, out_ref: (TC, Hs, Ws).
        ah = ah_ref[...]
        awT = awT_ref[...]

        def do_chunk(c0, n):
            xb = x_ref[pl.ds(c0, n), :, :]                        # (n, H, W)
            # W-interp: contract the existing last (lane) dim -> one MXU matmul
            # with M fused over n*H (no relayout of the x block).
            t1 = jnp.einsum("chw,wx->chx", xb, awT,
                            preferred_element_type=jnp.float32)   # (n, H, Ws) f32
            # H-interp: transposed matmul over the small H dim.
            o = jnp.einsum("yh,chx->cyx", ah, t1,
                           preferred_element_type=jnp.float32)    # (n, Hs, Ws) f32
            out_ref[pl.ds(c0, n), :, :] = o.astype(out_ref.dtype)

        if n_sub == 1:
            do_chunk(0, chunk)
        else:
            def body(i, carry):
                c0 = pl.multiple_of(i * chunk, chunk)
                do_chunk(c0, chunk)
                return carry
            lax.fori_loop(0, n_sub, body, 0, unroll=unroll)

    return kernel


# ----------------------------------------------------------------------------
# Pallas wrapper: bilinear resize (align_corners=True), NCHW.
# ----------------------------------------------------------------------------
def bilinear_resize_align_corners(x, Hs: int, Ws: int):
    B, C, H, W = x.shape
    in_itemsize = jnp.dtype(x.dtype).itemsize
    out_dtype = x.dtype
    out_itemsize = jnp.dtype(out_dtype).itemsize

    budget_bytes, vmem_limit = _vmem_budget()
    chunk = _pick_subchunk(C, H, W, Hs, Ws)
    TC = _pick_channel_tile(C, H, W, Hs, Ws, in_itemsize, out_itemsize,
                            budget_bytes, chunk)
    grid_c = -(-C // TC)          # trailing block may overrun C; Pallas pads/masks it
    n_sub = TC // chunk

    # Interp matrices: aw^T in x.dtype so bf16 inputs stay MXU-native for the
    # first matmul (bf16-quantized weights; ~1e-3 rel deviation vs f32 weights);
    # ah stays f32 so the second matmul matches the f32 partial.
    ah = jnp.asarray(_interp_matrix_np(Hs, H), dtype=jnp.float32)    # (Hs, H)
    awT = jnp.asarray(_interp_matrix_np(Ws, W).T, dtype=x.dtype)     # (W, Ws)

    kernel = _make_resize_kernel(chunk, n_sub)

    return pl.pallas_call(
        kernel,
        out_shape=jax.ShapeDtypeStruct((B, C, Hs, Ws), out_dtype),
        grid_spec=pltpu.PrefetchScalarGridSpec(
            num_scalar_prefetch=0,
            grid=(B, grid_c),
            in_specs=[
                pl.BlockSpec((None, TC, H, W), lambda b, c: (b, c, 0, 0)),
                pl.BlockSpec((Hs, H), lambda b, c: (0, 0)),
                pl.BlockSpec((W, Ws), lambda b, c: (0, 0)),
            ],
            out_specs=pl.BlockSpec((None, TC, Hs, Ws), lambda b, c: (b, c, 0, 0)),
        ),
        compiler_params=pltpu.CompilerParams(
            dimension_semantics=("parallel", "parallel"),
            vmem_limit_bytes=vmem_limit,
        ),
    )(x, ah, awT)


# ----------------------------------------------------------------------------
# TransitionUp.forward
# ----------------------------------------------------------------------------
def transition_up(x, skip, concat=True):
    B, C, H, W = x.shape
    Bs, Cs, Hs, Ws = skip.shape
    assert B == Bs, "batch mismatch"

    out = bilinear_resize_align_corners(x, Hs, Ws)
    if concat:
        # Channel concat is a pure contiguous memcpy; done as an XLA op (lane-dense,
        # no per-row masking, no per-step VMEM cost) per the perf review.
        out = jnp.concatenate([out, skip], axis=1)
    return out


# ----------------------------------------------------------------------------
# NumPy reference + test
# ----------------------------------------------------------------------------
def _ref_bilinear_align_corners(x_np, Hs, Ws):
    """Reference for F.interpolate(..., mode='bilinear', align_corners=True)."""
    B, C, H, W = x_np.shape
    out = np.zeros((B, C, Hs, Ws), dtype=np.float32)
    ys = np.arange(Hs) * (0.0 if Hs == 1 else (H - 1) / (Hs - 1))
    xs = np.arange(Ws) * (0.0 if Ws == 1 else (W - 1) / (Ws - 1))
    for oy, sy in enumerate(ys):
        y0 = int(np.floor(sy)); y1 = min(y0 + 1, H - 1); wy = sy - y0
        for ox, sx in enumerate(xs):
            x0 = int(np.floor(sx)); x1 = min(x0 + 1, W - 1); wx = sx - x0
            out[:, :, oy, ox] = (
                (1 - wy) * (1 - wx) * x_np[:, :, y0, x0]
                + (1 - wy) * wx * x_np[:, :, y0, x1]
                + wy * (1 - wx) * x_np[:, :, y1, x0]
                + wy * wx * x_np[:, :, y1, x1]
            )
    return out


if __name__ == "__main__":
    # TransitionUp.__init__ has no learnable parameters — nothing to initialize.
    key = jax.random.PRNGKey(0)
    kx, ks, kx2, ks2 = jax.random.split(key, 4)

    # Case 1: small even shapes, concat=True and concat=False.
    B, C, H, W = 2, 4, 8, 8       # low-res features
    Cs, Hs, Ws = 4, 16, 16        # skip (downsampling hardblock output)

    x = jax.random.normal(kx, (B, C, H, W), dtype=jnp.float32)
    skip = jax.random.normal(ks, (B, Cs, Hs, Ws), dtype=jnp.float32)

    out = jax.block_until_ready(transition_up(x, skip, concat=True))
    ref_interp = _ref_bilinear_align_corners(np.asarray(x), Hs, Ws)
    ref = np.concatenate([ref_interp, np.asarray(skip)], axis=1)
    np.testing.assert_allclose(np.asarray(out), ref, rtol=1e-5, atol=1e-5)
    assert out.shape == (B, C + Cs, Hs, Ws)

    out2 = jax.block_until_ready(transition_up(x, skip, concat=False))
    np.testing.assert_allclose(np.asarray(out2), ref_interp, rtol=1e-5, atol=1e-5)
    assert out2.shape == (B, C, Hs, Ws)

    # Case 2: channel counts with no nice common divisor (previously forced a
    # gcd=2 tile) — exercises the padded trailing channel block and the
    # in-kernel sub-chunk loop.
    C2, Cs2 = 20, 6
    x2 = jax.random.normal(kx2, (B, C2, H, W), dtype=jnp.float32)
    skip2 = jax.random.normal(ks2, (B, Cs2, Hs, Ws), dtype=jnp.float32)
    out3 = jax.block_until_ready(transition_up(x2, skip2, concat=True))
    ref3 = np.concatenate(
        [_ref_bilinear_align_corners(np.asarray(x2), Hs, Ws), np.asarray(skip2)],
        axis=1)
    np.testing.assert_allclose(np.asarray(out3), ref3, rtol=1e-5, atol=1e-5)
    assert out3.shape == (B, C2 + Cs2, Hs, Ws)

    print("KERNEL_OK")
</pallas_src>

<mosaic_0001>
module attributes {stable_mosaic.version = 11 : i64} {
  func.func @kernel(%arg0: i32, %arg1: i32, %arg2: memref<1x4x8x8xf32, #tpu.memory_space<vmem>>, %arg3: memref<16x8xf32, #tpu.memory_space<vmem>>, %arg4: memref<8x16xf32, #tpu.memory_space<vmem>>, %arg5: memref<1x4x16x16xf32, #tpu.memory_space<vmem>>) attributes {dimension_semantics = [#tpu.dimension_semantics<parallel>, #tpu.dimension_semantics<parallel>], iteration_bounds = array<i64: 2, 1>, scalar_prefetch = 0 : i64, scratch_operands = 0 : i64, tpu.core_type = #tpu.core_type<tc>, window_params = [{transform_indices = @transform_0, window_bounds = array<i64: 1, 4, 8, 8>}, {pipeline_mode = #tpu.pipeline_mode<synchronous>, transform_indices = @transform_1, window_bounds = array<i64: 16, 8>}, {pipeline_mode = #tpu.pipeline_mode<synchronous>, transform_indices = @transform_2, window_bounds = array<i64: 8, 16>}, {transform_indices = @transform_3, window_bounds = array<i64: 1, 4, 16, 16>}]} {
    %c0 = arith.constant 0 : index
    %c0_0 = arith.constant 0 : index
    %0 = vector.load %arg3[%c0, %c0_0] : memref<16x8xf32, #tpu.memory_space<vmem>>, vector<16x8xf32>
    %c0_1 = arith.constant 0 : index
    %c0_2 = arith.constant 0 : index
    %1 = vector.load %arg4[%c0_1, %c0_2] : memref<8x16xf32, #tpu.memory_space<vmem>>, vector<8x16xf32>
    %c0_3 = arith.constant 0 : index
    %c0_4 = arith.constant 0 : index
    %c0_5 = arith.constant 0 : index
    %c0_6 = arith.constant 0 : index
    %2 = vector.load %arg2[%c0_3, %c0_4, %c0_5, %c0_6] : memref<1x4x8x8xf32, #tpu.memory_space<vmem>>, vector<1x4x8x8xf32>
    %3 = vector.shape_cast %2 : vector<1x4x8x8xf32> to vector<4x8x8xf32>
    "tpu.trace_start"() <{level = 10 : i32, message = "chw,wx->chx"}> : () -> ()
    %cst = arith.constant dense<0.000000e+00> : vector<4x8x16xf32>
    %4 = tpu.matmul %3, %1, %cst {dimension_numbers = #tpu.dot_dimension_numbers<[2], [0], [0, 1], [1], [0, 0, 0, 1, 1, 1], [], []>} : vector<4x8x8xf32>, vector<8x16xf32>, vector<4x8x16xf32> -> vector<4x8x16xf32>
    "tpu.trace_stop"() : () -> ()
    "tpu.trace_start"() <{level = 10 : i32, message = "yh,chx->cyx"}> : () -> ()
    %cst_7 = arith.constant dense<0.000000e+00> : vector<4x16x16xf32>
    %5 = tpu.matmul %4, %0, %cst_7 {dimension_numbers = #tpu.dot_dimension_numbers<[1], [1], [0, 2], [0], [0, 0, 0, 2, 1, 0], [], []>} : vector<4x8x16xf32>, vector<16x8xf32>, vector<4x16x16xf32> -> vector<4x16x16xf32>
    %6 = tpu.transpose %5, [0, 2, 1] : vector<4x16x16xf32> -> vector<4x16x16xf32>
    "tpu.trace_stop"() : () -> ()
    %c0_8 = arith.constant 0 : index
    %c0_9 = arith.constant 0 : index
    %c0_10 = arith.constant 0 : index
    %c0_11 = arith.constant 0 : index
    %7 = vector.load %arg5[%c0_8, %c0_9, %c0_10, %c0_11] : memref<1x4x16x16xf32, #tpu.memory_space<vmem>>, vector<1x4x16x16xf32>
    %8 = vector.shape_cast %7 : vector<1x4x16x16xf32> to vector<4x16x16xf32>
    %9 = vector.shape_cast %6 : vector<4x16x16xf32> to vector<1x4x16x16xf32>
    tpu.vector_store %arg5[%c0_8, %c0_9, %c0_10, %c0_11], %9 {strides = array<i32>} : memref<1x4x16x16xf32, #tpu.memory_space<vmem>>, vector<1x4x16x16xf32>,
    return
  }
  func.func @transform_0(%arg0: i32, %arg1: i32) -> (i32, i32, i32, i32) {
    %c0_i32 = arith.constant 0 : i32
    %c0_i32_0 = arith.constant 0 : i32
    %c0_i32_1 = arith.constant 0 : i32
    return %arg0, %arg1, %c0_i32, %c0_i32_0 : i32, i32, i32, i32
  }
  func.func @transform_1(%arg0: i32, %arg1: i32) -> (i32, i32) {
    %c0_i32 = arith.constant 0 : i32
    %c0_i32_0 = arith.constant 0 : i32
    %c0_i32_1 = arith.constant 0 : i32
    return %c0_i32, %c0_i32_0 : i32, i32
  }
  func.func @transform_2(%arg0: i32, %arg1: i32) -> (i32, i32) {
    %c0_i32 = arith.constant 0 : i32
    %c0_i32_0 = arith.constant 0 : i32
    %c0_i32_1 = arith.constant 0 : i32
    return %c0_i32, %c0_i32_0 : i32, i32
  }
  func.func @transform_3(%arg0: i32, %arg1: i32) -> (i32, i32, i32, i32) {
    %c0_i32 = arith.constant 0 : i32
    %c0_i32_0 = arith.constant 0 : i32
    %c0_i32_1 = arith.constant 0 : i32
    return %arg0, %arg1, %c0_i32, %c0_i32_0 : i32, i32, i32, i32
  }
}

</mosaic_0001>

<llo_original>
// kernel: tpu_custom_call.1
$region0: #{tpu_custom_call.1}
  #allocation0 [shape = 'u32[]', space=smem, size = 0x4, offset = 0x4, fixed_abs, tag = 'smem constant byte address 0x4 - core index']
  #allocation1 [shape = 'u32[144,128]{1,0:T(1,128)}', space=vmem, size = 0x12000, scoped, tag = 'internal scratch']
  %s0 = inlined_call_operand.hbm [shape: f32[2,4,8,8], index: 0, kind: input, shape index: {}]
  %s1 = inlined_call_operand.vmem [shape: f32[16,8], index: 1, kind: input, shape index: {}]
  %s2 = inlined_call_operand.vmem [shape: f32[8,16], index: 2, kind: input, shape index: {}]
  %s3 = inlined_call_operand.hbm [shape: f32[2,4,16,16], index: 3, kind: output, shape index: {}]
  %s4 = sld [smem:[#allocation0]]
  $region49: #{tpu_custom_call.1} parent=0
    _
  %s6 = ssub.s32 1, %s4
  %s7 = scalar_select 0, %s6, %s4
  $region1: #{tpu_custom_call.1} parent=0
    #allocation2 [shape = 'u8[32768]{0}', space=vmem, size = 0x8000, scoped, tag = 'input window, operand 0']
    #allocation3 [shape = 's32[2]{0}', space=sflag, size = 0x8, scoped, tag = 'scoped memory for tpu_custom_call.1']
    #allocation4 [shape = 's32[2]{0}', space=sflag, size = 0x8, scoped, tag = 'scoped memory for tpu_custom_call.1']
    #allocation5 [shape = 'u8[65536]{0}', space=vmem, size = 0x10000, scoped, tag = 'output window, operand 0']
    %8 = vsyncpa [#allocation3], 0
    %s9 = scalar_lea.sflag [#allocation3], 1
    %10 = vsyncpa %s9, 0
    %11 = vsyncpa [#allocation4], 0
    %s12 = scalar_lea.sflag [#allocation4], 1
    %13 = vsyncpa %s12, 0
    loop: start=0, step=1, limit=4
    $region2: #{tpu_custom_call.1} parent=1 // loop_pre_header
      _
    $region3: #{tpu_custom_call.1} parent=1 // loop_header
      %s15 = sphi 0, %s19
      %p16 = scmp.ge.s32.totalorder %s15, 4
      %s22 = sphi 0, %s34
      %s23 = sphi 0, %s30
      %s24 = sphi 0, %s22
      %s25 = sphi 0, %s23
      %s26 = sphi 0, %s24
      %s27 = sphi 0, %s25
      %s39 = sphi 0, %s41
      %s42 = sphi 0, %s39
      %s43 = sphi 0, %s42
      %s59 = sphi 0, %s43
      %s63 = sphi 0, %s63
      %s65 = sphi 0, %s63
      %s66 = sphi 0, %s65
      %s80 = sphi 0, %s66
      %s84 = sphi 0, %s84
      %s86 = sphi 0, %s84
      %s87 = sphi 0, %s86
      %s101 = sphi 0, %s87
      %s109 = sphi 0, %s111
      %s112 = sphi 0, %s109
      %s113 = sphi 0, %s112
      %s129 = sphi 0, %s113
    $region4: #{tpu_custom_call.1} parent=1 // loop_header_branch
      %18 = sbr.rel (%p16) target = $region8
    $region5: #{tpu_custom_call.1} parent=1 // loop_body
      %s20 = ssub.s32 %s15, 1
      %s21 = ssub.s32 %s15, 2
      %s28 = sadd.s32 1, %s23
      %p29 = scmp.ge.s32.totalorder %s28, 1
      %s30 = scalar_select %p29, 0, %s28
      %s31 = sadd.s32 1, %s22
      %s32 = scalar_select %p29, %s31, %s22
      %p33 = scmp.ge.s32.totalorder %s32, 2
      %s34 = scalar_select %p33, 0, %s32
      %s35 = ssub.s32 %s22, %s34
      %s36 = ssub.s32 %s23, %s30
      %s37 = sor.u32 %s35, %s36
      %p38 = scmp.eq.s32.totalorder %s37, 0
      %s40 = sadd.s32 %s39, 1
      %s41 = scalar_select %p38, %s39, %s40
      %p44 = pneg %p38
      %p45 = scmp.eq.s32.totalorder %s15, 1
      %p46 = por %p44, %p45
      %p47 = scmp.ne.s32.totalorder %s39, %s42
      %p48 = scmp.eq.s32.totalorder %s15, 0
      %p49 = por %p47, %p48
      %p50 = scmp.ne.s32.totalorder %s39, %s42
      %p51 = scmp.eq.s32.totalorder %s20, 1
      %p52 = por %p50, %p51
      %p53 = scmp.ne.s32.totalorder %s42, %s43
      %p54 = scmp.eq.s32.totalorder %s20, 0
      %p55 = por %p53, %p54
      %p56 = scmp.ne.s32.totalorder %s42, %s43
      %p57 = scmp.eq.s32.totalorder %s21, 1
      %p58 = por %p56, %p57
      %p60 = scmp.ne.s32.totalorder %s43, %s59
      %p61 = scmp.eq.s32.totalorder %s21, 0
      %p62 = por %p60, %p61
      %s64 = sadd.s32 %s63, 1
      %p67 = scmp.eq.s32.totalorder %s15, 1
      %p68 = scmp.ne.s32.totalorder %s63, %s65
      %p69 = scmp.eq.s32.totalorder %s15, 0
      %p70 = por %p68, %p69
      %p71 = scmp.ne.s32.totalorder %s63, %s65
      %p72 = scmp.eq.s32.totalorder %s20, 1
      %p73 = por %p71, %p72
      %p74 = scmp.ne.s32.totalorder %s65, %s66
      %p75 = scmp.eq.s32.totalorder %s20, 0
      %p76 = por %p74, %p75
      %p77 = scmp.ne.s32.totalorder %s65, %s66
      %p78 = scmp.eq.s32.totalorder %s21, 1
      %p79 = por %p77, %p78
      %p81 = scmp.ne.s32.totalorder %s66, %s80
      %p82 = scmp.eq.s32.totalorder %s21, 0
      %p83 = por %p81, %p82
      %s85 = sadd.s32 %s84, 1
      %p88 = scmp.eq.s32.totalorder %s15, 1
      %p89 = scmp.ne.s32.totalorder %s84, %s86
      %p90 = scmp.eq.s32.totalorder %s15, 0
      %p91 = por %p89, %p90
      %p92 = scmp.ne.s32.totalorder %s84, %s86
      %p93 = scmp.eq.s32.totalorder %s20, 1
      %p94 = por %p92, %p93
      %p95 = scmp.ne.s32.totalorder %s86, %s87
      %p96 = scmp.eq.s32.totalorder %s20, 0
      %p97 = por %p95, %p96
      %p98 = scmp.ne.s32.totalorder %s86, %s87
      %p99 = scmp.eq.s32.totalorder %s21, 1
      %p100 = por %p98, %p99
      %p102 = scmp.ne.s32.totalorder %s87, %s101
      %p103 = scmp.eq.s32.totalorder %s21, 0
      %p104 = por %p102, %p103
      %s105 = ssub.s32 %s22, %s34
      %s106 = ssub.s32 %s23, %s30
      %s107 = sor.u32 %s105, %s106
      %p108 = scmp.eq.s32.totalorder %s107, 0
      %s110 = sadd.s32 %s109, 1
      %s111 = scalar_select %p108, %s109, %s110
      %p114 = pneg %p108
      %p115 = scmp.eq.s32.totalorder %s15, 1
      %p116 = por %p114, %p115
      %p117 = scmp.ne.s32.totalorder %s109, %s112
      %p118 = scmp.eq.s32.totalorder %s15, 0
      %p119 = por %p117, %p118
      %p120 = scmp.ne.s32.totalorder %s109, %s112
      %p121 = scmp.eq.s32.totalorder %s20, 1
      %p122 = por %p120, %p121
      %p123 = scmp.ne.s32.totalorder %s112, %s113
      %p124 = scmp.eq.s32.totalorder %s20, 0
      %p125 = por %p123, %p124
      %p126 = scmp.ne.s32.totalorder %s112, %s113
      %p127 = scmp.eq.s32.totalorder %s21, 1
      %p128 = por %p126, %p127
      %p130 = scmp.ne.s32.totalorder %s113, %s129
      %p131 = scmp.eq.s32.totalorder %s21, 0
      %p132 = por %p130, %p131
      %p133 = scmp.le.s32.totalorder 1, %s15
      %p134 = scmp.lt.s32.totalorder %s15, 3
      %p135 = pnand %p133, %p134
      %p136 = pneg %p135
      // Predicated region
      $region9: #{tpu_custom_call.1} parent=5 // pred_check
        _
      $region10: #{tpu_custom_call.1} parent=5 // pred_check_branch
        %138 = sbr.rel (%p135) target = $region12
      $region11: #{tpu_custom_call.1} parent=5 // pred_region
        %s139 = ssub.s32 %s15, 1
        // Predicated region
        $region13: #{tpu_custom_call.1} parent=11 // pred_check
          %p140 = pneg %p76
        $region14: #{tpu_custom_call.1} parent=11 // pred_check_branch
          %142 = sbr.rel (%p140) target = $region16
        $region15: #{tpu_custom_call.1} parent=11 // pred_region
          _
        $region16: #{tpu_custom_call.1} parent=11 // pred_fallthru
          _
        // Predicated region
        $region17: #{tpu_custom_call.1} parent=11 // pred_check
          %p143 = pneg %p97
        $region18: #{tpu_custom_call.1} parent=11 // pred_check_branch
          %145 = sbr.rel (%p143) target = $region20
        $region19: #{tpu_custom_call.1} parent=11 // pred_region
          _
        $region20: #{tpu_custom_call.1} parent=11 // pred_fallthru
          _
      $region12: #{tpu_custom_call.1} parent=5 // pred_fallthru
        _
      %p146 = scmp.lt.s32.totalorder %s15, 2
      // Predicated region
      $region21: #{tpu_custom_call.1} parent=5 // pred_check
        %p147 = pneg %p146
      $region22: #{tpu_custom_call.1} parent=5 // pred_check_branch
        %149 = sbr.rel (%p147) target = $region24
      $region23: #{tpu_custom_call.1} parent=5 // pred_region
        // Predicated region
        $region25: #{tpu_custom_call.1} parent=23 // pred_check
          %p150 = pneg %p49
        $region26: #{tpu_custom_call.1} parent=23 // pred_check_branch
          %152 = sbr.rel (%p150) target = $region28
        $region27: #{tpu_custom_call.1} parent=23 // pred_region
          %s153 = sand.u32 %s39, 1
          %s154 = scalar_lea.sflag [#allocation3], %s153
          %s155 = sand.u32 %s39, 1
          %s156 = smul.addr %s155, 32
          %s157 = scalar_lea.vmem [#allocation2], %s156
          %s158 = smul.u32 4, %s23
          %s160 = ssub.s32 512, 512
          %161 = vsyncadd %s154, %s160
          %s162 = smul.addr %s22, 4
          %s163 = sadd.s32 %s158, %s162
          %s164 = smul.addr %s163, 128
          %s165 = scalar_lea.hbm %s0, %s164
          %s166 = sshll.u32 %s157, 4
          %s167 = int_to_ptr.vmem [resolvable:$true] %s166
          %172 = dma.hbm_to_vmem [thread:$0]  %s165, 512, %s167, %s154, 128, 128, 8
        $region28: #{tpu_custom_call.1} parent=23 // pred_fallthru
          _
      $region24: #{tpu_custom_call.1} parent=5 // pred_fallthru
        _
      %p173 = scmp.le.s32.totalorder 1, %s15
      %p174 = scmp.lt.s32.totalorder %s15, 3
      %p175 = pnand %p173, %p174
      %p176 = pneg %p175
      // Predicated region
      $region29: #{tpu_custom_call.1} parent=5 // pred_check
        _
      $region30: #{tpu_custom_call.1} parent=5 // pred_check_branch
        %178 = sbr.rel (%p175) target = $region32
      $region31: #{tpu_custom_call.1} parent=5 // pred_region
        %s179 = ssub.s32 %s15, 1
        %s180 = sand.u32 %s42, 1
        %s181 = scalar_lea.sflag [#allocation3], %s180
        %s182 = sand.u32 %s42, 1
        %s183 = smul.addr %s182, 32
        %s184 = scalar_lea.vmem [#allocation2], %s183
        // Predicated region
        $region33: #{tpu_custom_call.1} parent=31 // pred_check
          %p185 = pneg %p55
        $region34: #{tpu_custom_call.1} parent=31 // pred_check_branch
          %187 = sbr.rel (%p185) target = $region36
        $region35: #{tpu_custom_call.1} parent=31 // pred_region
          %188 = dma.done %s181, 512
        $region36: #{tpu_custom_call.1} parent=31 // pred_fallthru
          _
        %s189 = sand.u32 %s42, 1
        %s190 = scalar_lea.sflag [#allocation3], %s189
        %s191 = sand.u32 %s42, 1
        %s192 = smul.addr %s191, 32
        %s193 = scalar_lea.vmem [#allocation2], %s192
        %p194 = pneg %p55
        %p195 = pneg %p52
        %p196 = pneg %p76
        %p197 = pneg %p73
        %p198 = pneg %p97
        %p199 = pneg %p94
        %p200 = pneg %p125
        %p201 = pneg %p122
        %s202 = sand.u32 %s112, 1
        %s203 = scalar_lea.sflag [#allocation4], %s202
        %s204 = sand.u32 %s112, 1
        %s205 = smul.addr %s204, 64
        %s206 = scalar_lea.vmem [#allocation5], %s205
        %s207 = smul.u32 4, %s25
        %s208 = smul.u32 4, %s25
        %v209 = vld [vmem:[%s1] sm:$0xff]
        %v210 = vld [vmem:[%s1 + $0x8] sm:$0xff]
        %v211 = vld [vmem:[%s2] sm:$0xff]
        %v212 = vld [vmem:[%s184] sm:$0xff]
        %v213 = vld [vmem:[%s184 + $0x8] sm:$0xff]
        %v214 = vld [vmem:[%s184 + $0x10] sm:$0xff]
        %v215 = vld [vmem:[%s184 + $0x18] sm:$0xff]
        %vm216 = vcmask 64512
        %v218 = vsel %vm216, %v212, 0
        %v221 = vsel %vm216, %v213, 0
        %v224 = vsel %vm216, %v214, 0
        %v227 = vsel %vm216, %v215, 0
        %229 = vmatprep.subr.mxu0 0.0
        %230 = vmatpush1.msra.mxu0 %v211
        %231 = vmatprep.subr.mxu0 0.0
        %232 = vmatpush1.msra.mxu0 0.0
        %233 = vmatprep.subr.mxu0 0.0
        %234 = vmatpush1.msra.mxu0 0.0
        %235 = vmatprep.subr.mxu0 0.0
        %236 = vmatpush1.msra.mxu0 0.0
        %237 = vmatprep.subr.mxu0 0.0
        %238 = vmatpush1.msra.mxu0 0.0
        %239 = vmatprep.subr.mxu0 0.0
        %240 = vmatpush1.msra.mxu0 0.0
        %241 = vmatprep.subr.mxu0 0.0
        %242 = vmatpush1.msra.mxu0 0.0
        %243 = vmatprep.subr.mxu0 0.0
        %244 = vmatpush1.msra.mxu0 0.0
        %245 = vmatprep.subr.mxu0 0.0
        %246 = vmatpush1.msra.mxu0 0.0
        %247 = vmatprep.subr.mxu0 0.0
        %248 = vmatpush1.msra.mxu0 0.0
        %249 = vmatprep.subr.mxu0 0.0
        %250 = vmatpush1.msra.mxu0 0.0
        %251 = vmatprep.subr.mxu0 0.0
        %252 = vmatpush1.msra.mxu0 0.0
        %253 = vmatprep.subr.mxu0 0.0
        %254 = vmatpush1.msra.mxu0 0.0
        %255 = vmatprep.subr.mxu0 0.0
        %256 = vmatpush1.msra.mxu0 0.0
        %257 = vmatprep.subr.mxu0 0.0
        %258 = vmatpush1.msra.mxu0 0.0
        %259 = vmatprep.subr.mxu0 0.0
        %260 = vmatpush1.msra.mxu0 0.0
        %261 = vmatprep.subr.mxu0 0.0
        %262 = vmatpush1.msra.mxu0 0.0
        %263 = vmatprep.subr.mxu0 0.0
        %264 = vmatpush1.msra.mxu0 0.0
        %265 = vmatprep.subr.mxu0 0.0
        %266 = vmatpush1.msra.mxu0 0.0
        %267 = vmatprep.subr.mxu0 0.0
        %268 = vmatpush1.msra.mxu0 0.0
        %269 = vmatprep.subr.mxu0 0.0
        %270 = vmatpush1.msra.mxu0 0.0
        %271 = vmatprep.subr.mxu0 0.0
        %272 = vmatpush1.msra.mxu0 0.0
        %273 = vmatprep.subr.mxu0 0.0
        %274 = vmatpush1.msra.mxu0 0.0
        %275 = vmatprep.subr.mxu0 0.0
        %276 = vmatpush1.msra.mxu0 0.0
        %277 = vmatprep.subr.mxu0 0.0
        %278 = vmatpush1.msra.mxu0 0.0
        %279 = vmatprep.subr.mxu0 0.0
        %280 = vmatpush1.msra.mxu0 0.0
        %281 = vmatprep.subr.mxu0 0.0
        %282 = vmatpush1.msra.mxu0 0.0
        %283 = vmatprep.subr.mxu0 0.0
        %284 = vmatpush1.msra.mxu0 0.0
        %285 = vmatprep.subr.mxu0 0.0
        %286 = vmatpush1.msra.mxu0 0.0
        %287 = vmatprep.subr.mxu0 0.0
        %288 = vmatpush1.msra.mxu0 0.0
        %289 = vmatprep.subr.mxu0 0.0
        %290 = vmatpush1.msra.mxu0 0.0
        %291 = vmatprep.subr.mxu0 0.0
        %292 = vmatpush1.msra.mxu0 0.0
        %293 = vmatprep.mubr.f32.mxu0 0.0
        %294 = vmatmul.mubr.f32.gmra.mrb[0].mxu0 %v218
        %v295 = vpop.f32.mrb[0].mxu0
        %v296 = vadd.f32 0.0, %v295
        %v297 = vpop.f32.mrb[0].mxu0
        %298 = vmatprep.mubr.f32.mxu0 0.0
        %299 = vmatmul.mubr.f32.gmra.mrb[0].mxu0 %v221
        %v300 = vpop.f32.mrb[0].mxu0
        %v301 = vadd.f32 0.0, %v300
        %v302 = vpop.f32.mrb[0].mxu0
        %303 = vmatprep.mubr.f32.mxu0 0.0
        %304 = vmatmul.mubr.f32.gmra.mrb[0].mxu0 %v224
        %v305 = vpop.f32.mrb[0].mxu0
        %v306 = vadd.f32 0.0, %v305
        %v307 = vpop.f32.mrb[0].mxu0
        %308 = vmatprep.mubr.f32.mxu0 0.0
        %309 = vmatmul.mubr.f32.gmra.mrb[0].mxu0 %v227
        %v310 = vpop.f32.mrb[0].mxu0
        %v311 = vadd.f32 0.0, %v310
        %v312 = vpop.f32.mrb[0].mxu0
        %313 = vdwg.mxu0
        %314 = vxpose.xlu0.b32.start [1/16] %v296, 128
        %315 = vxpose.xlu0.b32.cont [2/16] 0.0, 128
        %316 = vxpose.xlu0.b32.cont [3/16] 0.0, 128
        %317 = vxpose.xlu0.b32.cont [4/16] 0.0, 128
        %318 = vxpose.xlu0.b32.cont [5/16] 0.0, 128
        %319 = vxpose.xlu0.b32.cont [6/16] 0.0, 128
        %320 = vxpose.xlu0.b32.cont [7/16] 0.0, 128
        %321 = vxpose.xlu0.b32.cont [8/16] 0.0, 128
        %322 = vxpose.xlu0.b32.cont [9/16] 0.0, 128
        %323 = vxpose.xlu0.b32.cont [10/16] 0.0, 128
        %324 = vxpose.xlu0.b32.cont [11/16] 0.0, 128
        %325 = vxpose.xlu0.b32.cont [12/16] 0.0, 128
        %326 = vxpose.xlu0.b32.cont [13/16] 0.0, 128
        %327 = vxpose.xlu0.b32.cont [14/16] 0.0, 128
        %328 = vxpose.xlu0.b32.cont [15/16] 0.0, 128
        %329 = vxpose.xlu0.b32.end [16/16] 0.0, 128
        %v330 = vpop.trf.xlu0
        %v331 = vpop.trf.xlu0
        %v332 = vpop.trf.xlu0
        %v333 = vpop.trf.xlu0
        %v334 = vpop.trf.xlu0
        %v335 = vpop.trf.xlu0
        %v336 = vpop.trf.xlu0
        %v337 = vpop.trf.xlu0
        %v338 = vpop.trf.xlu0
        %v339 = vpop.trf.xlu0
        %v340 = vpop.trf.xlu0
        %v341 = vpop.trf.xlu0
        %v342 = vpop.trf.xlu0
        %v343 = vpop.trf.xlu0
        %v344 = vpop.trf.xlu0
        %v345 = vpop.trf.xlu0
        %346 = vxpose.xlu0.b32.start [1/16] %v301, 128
        %347 = vxpose.xlu0.b32.cont [2/16] 0.0, 128
        %348 = vxpose.xlu0.b32.cont [3/16] 0.0, 128
        %349 = vxpose.xlu0.b32.cont [4/16] 0.0, 128
        %350 = vxpose.xlu0.b32.cont [5/16] 0.0, 128
        %351 = vxpose.xlu0.b32.cont [6/16] 0.0, 128
        %352 = vxpose.xlu0.b32.cont [7/16] 0.0, 128
        %353 = vxpose.xlu0.b32.cont [8/16] 0.0, 128
        %354 = vxpose.xlu0.b32.cont [9/16] 0.0, 128
        %355 = vxpose.xlu0.b32.cont [10/16] 0.0, 128
        %356 = vxpose.xlu0.b32.cont [11/16] 0.0, 128
        %357 = vxpose.xlu0.b32.cont [12/16] 0.0, 128
        %358 = vxpose.xlu0.b32.cont [13/16] 0.0, 128
        %359 = vxpose.xlu0.b32.cont [14/16] 0.0, 128
        %360 = vxpose.xlu0.b32.cont [15/16] 0.0, 128
        %361 = vxpose.xlu0.b32.end [16/16] 0.0, 128
        %v362 = vpop.trf.xlu0
        %v363 = vpop.trf.xlu0
        %v364 = vpop.trf.xlu0
        %v365 = vpop.trf.xlu0
        %v366 = vpop.trf.xlu0
        %v367 = vpop.trf.xlu0
        %v368 = vpop.trf.xlu0
        %v369 = vpop.trf.xlu0
        %v370 = vpop.trf.xlu0
        %v371 = vpop.trf.xlu0
        %v372 = vpop.trf.xlu0
        %v373 = vpop.trf.xlu0
        %v374 = vpop.trf.xlu0
        %v375 = vpop.trf.xlu0
        %v376 = vpop.trf.xlu0
        %v377 = vpop.trf.xlu0
        %378 = vxpose.xlu0.b32.start [1/16] %v306, 128
        %379 = vxpose.xlu0.b32.cont [2/16] 0.0, 128
        %380 = vxpose.xlu0.b32.cont [3/16] 0.0, 128
        %381 = vxpose.xlu0.b32.cont [4/16] 0.0, 128
        %382 = vxpose.xlu0.b32.cont [5/16] 0.0, 128
        %383 = vxpose.xlu0.b32.cont [6/16] 0.0, 128
        %384 = vxpose.xlu0.b32.cont [7/16] 0.0, 128
        %385 = vxpose.xlu0.b32.cont [8/16] 0.0, 128
        %386 = vxpose.xlu0.b32.cont [9/16] 0.0, 128
        %387 = vxpose.xlu0.b32.cont [10/16] 0.0, 128
        %388 = vxpose.xlu0.b32.cont [11/16] 0.0, 128
        %389 = vxpose.xlu0.b32.cont [12/16] 0.0, 128
        %390 = vxpose.xlu0.b32.cont [13/16] 0.0, 128
        %391 = vxpose.xlu0.b32.cont [14/16] 0.0, 128
        %392 = vxpose.xlu0.b32.cont [15/16] 0.0, 128
        %393 = vxpose.xlu0.b32.end [16/16] 0.0, 128
        %v394 = vpop.trf.xlu0
        %v395 = vpop.trf.xlu0
        %v396 = vpop.trf.xlu0
        %v397 = vpop.trf.xlu0
        %v398 = vpop.trf.xlu0
        %v399 = vpop.trf.xlu0
        %v400 = vpop.trf.xlu0
        %v401 = vpop.trf.xlu0
        %v402 = vpop.trf.xlu0
        %v403 = vpop.trf.xlu0
        %v404 = vpop.trf.xlu0
        %v405 = vpop.trf.xlu0
        %v406 = vpop.trf.xlu0
        %v407 = vpop.trf.xlu0
        %v408 = vpop.trf.xlu0
        %v409 = vpop.trf.xlu0
        %410 = vxpose.xlu0.b32.start [1/16] %v311, 128
        %411 = vxpose.xlu0.b32.cont [2/16] 0.0, 128
        %412 = vxpose.xlu0.b32.cont [3/16] 0.0, 128
        %413 = vxpose.xlu0.b32.cont [4/16] 0.0, 128
        %414 = vxpose.xlu0.b32.cont [5/16] 0.0, 128
        %415 = vxpose.xlu0.b32.cont [6/16] 0.0, 128
        %416 = vxpose.xlu0.b32.cont [7/16] 0.0, 128
        %417 = vxpose.xlu0.b32.cont [8/16] 0.0, 128
        %418 = vxpose.xlu0.b32.cont [9/16] 0.0, 128
        %419 = vxpose.xlu0.b32.cont [10/16] 0.0, 128
        %420 = vxpose.xlu0.b32.cont [11/16] 0.0, 128
        %421 = vxpose.xlu0.b32.cont [12/16] 0.0, 128
        %422 = vxpose.xlu0.b32.cont [13/16] 0.0, 128
        %423 = vxpose.xlu0.b32.cont [14/16] 0.0, 128
        %424 = vxpose.xlu0.b32.cont [15/16] 0.0, 128
        %425 = vxpose.xlu0.b32.end [16/16] 0.0, 128
        %v426 = vpop.trf.xlu0
        %v427 = vpop.trf.xlu0
        %v428 = vpop.trf.xlu0
        %v429 = vpop.trf.xlu0
        %v430 = vpop.trf.xlu0
        %v431 = vpop.trf.xlu0
        %v432 = vpop.trf.xlu0
        %v433 = vpop.trf.xlu0
        %v434 = vpop.trf.xlu0
        %v435 = vpop.trf.xlu0
        %v436 = vpop.trf.xlu0
        %v437 = vpop.trf.xlu0
        %v438 = vpop.trf.xlu0
        %v439 = vpop.trf.xlu0
        %v440 = vpop.trf.xlu0
        %v441 = vpop.trf.xlu0
        %v443 = vsel %vm216, %v330, 0
        %v446 = vsel %vm216, %v331, 0
        %v449 = vsel %vm216, %v362, 0
        %v452 = vsel %vm216, %v363, 0
        %v455 = vsel %vm216, %v394, 0
        %v458 = vsel %vm216, %v395, 0
        %v461 = vsel %vm216, %v426, 0
        %v464 = vsel %vm216, %v427, 0
        %v467 = vsel %vm216, %v209, 0
        %v470 = vsel %vm216, %v210, 0
        %472 = vmatprep.subr.mxu0 0.0
        %473 = vmatpush1.xpose.msra.mxu0 %v467
        %474 = vmatprep.subr.mxu0 0.0
        %475 = vmatpush1.xpose.msra.mxu0 %v470
        %476 = vmatprep.subr.mxu0 0.0
        %477 = vmatpush1.xpose.msra.mxu0 0.0
        %478 = vmatprep.subr.mxu0 0.0
        %479 = vmatpush1.xpose.msra.mxu0 0.0
        %480 = vmatprep.subr.mxu0 0.0
        %481 = vmatpush1.xpose.msra.mxu0 0.0
        %482 = vmatprep.subr.mxu0 0.0
        %483 = vmatpush1.xpose.msra.mxu0 0.0
        %484 = vmatprep.subr.mxu0 0.0
        %485 = vmatpush1.xpose.msra.mxu0 0.0
        %486 = vmatprep.subr.mxu0 0.0
        %487 = vmatpush1.xpose.msra.mxu0 0.0
        %488 = vmatprep.subr.mxu0 0.0
        %489 = vmatpush1.xpose.msra.mxu0 0.0
        %490 = vmatprep.subr.mxu0 0.0
        %491 = vmatpush1.xpose.msra.mxu0 0.0
        %492 = vmatprep.subr.mxu0 0.0
        %493 = vmatpush1.xpose.msra.mxu0 0.0
        %494 = vmatprep.subr.mxu0 0.0
        %495 = vmatpush1.xpose.msra.mxu0 0.0
        %496 = vmatprep.subr.mxu0 0.0
        %497 = vmatpush1.xpose.msra.mxu0 0.0
        %498 = vmatprep.subr.mxu0 0.0
        %499 = vmatpush1.xpose.msra.mxu0 0.0
        %500 = vmatprep.subr.mxu0 0.0
        %501 = vmatpush1.xpose.msra.mxu0 0.0
        %502 = vmatprep.subr.mxu0 0.0
        %503 = vmatpush1.xpose.msra.mxu0 0.0
        %504 = vmatprep.subr.mxu0 0.0
        %505 = vmatpush1.xpose.msra.mxu0 0.0
        %506 = vmatprep.subr.mxu0 0.0
        %507 = vmatpush1.xpose.msra.mxu0 0.0
        %508 = vmatprep.subr.mxu0 0.0
        %509 = vmatpush1.xpose.msra.mxu0 0.0
        %510 = vmatprep.subr.mxu0 0.0
        %511 = vmatpush1.xpose.msra.mxu0 0.0
        %512 = vmatprep.subr.mxu0 0.0
        %513 = vmatpush1.xpose.msra.mxu0 0.0
        %514 = vmatprep.subr.mxu0 0.0
        %515 = vmatpush1.xpose.msra.mxu0 0.0
        %516 = vmatprep.subr.mxu0 0.0
        %517 = vmatpush1.xpose.msra.mxu0 0.0
        %518 = vmatprep.subr.mxu0 0.0
        %519 = vmatpush1.xpose.msra.mxu0 0.0
        %520 = vmatprep.subr.mxu0 0.0
        %521 = vmatpush1.xpose.msra.mxu0 0.0
        %522 = vmatprep.subr.mxu0 0.0
        %523 = vmatpush1.xpose.msra.mxu0 0.0
        %524 = vmatprep.subr.mxu0 0.0
        %525 = vmatpush1.xpose.msra.mxu0 0.0
        %526 = vmatprep.subr.mxu0 0.0
        %527 = vmatpush1.xpose.msra.mxu0 0.0
        %528 = vmatprep.subr.mxu0 0.0
        %529 = vmatpush1.xpose.msra.mxu0 0.0
        %530 = vmatprep.subr.mxu0 0.0
        %531 = vmatpush1.xpose.msra.mxu0 0.0
        %532 = vmatprep.subr.mxu0 0.0
        %533 = vmatpush1.xpose.msra.mxu0 0.0
        %534 = vmatprep.subr.mxu0 0.0
        %535 = vmatpush1.xpose.msra.mxu0 0.0
        %536 = vmatprep.mubr.f32.mxu0 0.0
        %537 = vmatmul.mubr.f32.gmra.mrb[0].mxu0 %v443
        %v538 = vpop.f32.mrb[0].mxu0
        %v539 = vadd.f32 0.0, %v538
        %v540 = vpop.f32.mrb[0].mxu0
        %541 = vmatprep.mubr.f32.mxu0 0.0
        %542 = vmatmul.mubr.f32.gmra.mrb[0].mxu0 %v446
        %v543 = vpop.f32.mrb[0].mxu0
        %v544 = vadd.f32 0.0, %v543
        %v545 = vpop.f32.mrb[0].mxu0
        %546 = vmatprep.mubr.f32.mxu0 0.0
        %547 = vmatmul.mubr.f32.gmra.mrb[0].mxu0 %v449
        %v548 = vpop.f32.mrb[0].mxu0
        %v549 = vadd.f32 0.0, %v548
        %v550 = vpop.f32.mrb[0].mxu0
        %551 = vmatprep.mubr.f32.mxu0 0.0
        %552 = vmatmul.mubr.f32.gmra.mrb[0].mxu0 %v452
        %v553 = vpop.f32.mrb[0].mxu0
        %v554 = vadd.f32 0.0, %v553
        %v555 = vpop.f32.mrb[0].mxu0
        %556 = vmatprep.mubr.f32.mxu0 0.0
        %557 = vmatmul.mubr.f32.gmra.mrb[0].mxu0 %v455
        %v558 = vpop.f32.mrb[0].mxu0
        %v559 = vadd.f32 0.0, %v558
        %v560 = vpop.f32.mrb[0].mxu0
        %561 = vmatprep.mubr.f32.mxu0 0.0
        %562 = vmatmul.mubr.f32.gmra.mrb[0].mxu0 %v458
        %v563 = vpop.f32.mrb[0].mxu0
        %v564 = vadd.f32 0.0, %v563
        %v565 = vpop.f32.mrb[0].mxu0
        %566 = vmatprep.mubr.f32.mxu0 0.0
        %567 = vmatmul.mubr.f32.gmra.mrb[0].mxu0 %v461
        %v568 = vpop.f32.mrb[0].mxu0
        %v569 = vadd.f32 0.0, %v568
        %v570 = vpop.f32.mrb[0].mxu0
        %571 = vmatprep.mubr.f32.mxu0 0.0
        %572 = vmatmul.mubr.f32.gmra.mrb[0].mxu0 %v464
        %v573 = vpop.f32.mrb[0].mxu0
        %v574 = vadd.f32 0.0, %v573
        %v575 = vpop.f32.mrb[0].mxu0
        %576 = vdwg.mxu0
        %577 = vxpose.xlu0.b32.start [1/16] %v539, 128
        %578 = vxpose.xlu0.b32.cont [2/16] %v544, 128
        %579 = vxpose.xlu0.b32.cont [3/16] 0.0, 128
        %580 = vxpose.xlu0.b32.cont [4/16] 0.0, 128
        %581 = vxpose.xlu0.b32.cont [5/16] 0.0, 128
        %582 = vxpose.xlu0.b32.cont [6/16] 0.0, 128
        %583 = vxpose.xlu0.b32.cont [7/16] 0.0, 128
        %584 = vxpose.xlu0.b32.cont [8/16] 0.0, 128
        %585 = vxpose.xlu0.b32.cont [9/16] 0.0, 128
        %586 = vxpose.xlu0.b32.cont [10/16] 0.0, 128
        %587 = vxpose.xlu0.b32.cont [11/16] 0.0, 128
        %588 = vxpose.xlu0.b32.cont [12/16] 0.0, 128
        %589 = vxpose.xlu0.b32.cont [13/16] 0.0, 128
        %590 = vxpose.xlu0.b32.cont [14/16] 0.0, 128
        %591 = vxpose.xlu0.b32.cont [15/16] 0.0, 128
        %592 = vxpose.xlu0.b32.end [16/16] 0.0, 128
        %v593 = vpop.trf.xlu0
        %v594 = vpop.trf.xlu0
        %v595 = vpop.trf.xlu0
        %v596 = vpop.trf.xlu0
        %v597 = vpop.trf.xlu0
        %v598 = vpop.trf.xlu0
        %v599 = vpop.trf.xlu0
        %v600 = vpop.trf.xlu0
        %v601 = vpop.trf.xlu0
        %v602 = vpop.trf.xlu0
        %v603 = vpop.trf.xlu0
        %v604 = vpop.trf.xlu0
        %v605 = vpop.trf.xlu0
        %v606 = vpop.trf.xlu0
        %v607 = vpop.trf.xlu0
        %v608 = vpop.trf.xlu0
        %609 = vxpose.xlu0.b32.start [1/16] %v549, 128
        %610 = vxpose.xlu0.b32.cont [2/16] %v554, 128
        %611 = vxpose.xlu0.b32.cont [3/16] 0.0, 128
        %612 = vxpose.xlu0.b32.cont [4/16] 0.0, 128
        %613 = vxpose.xlu0.b32.cont [5/16] 0.0, 128
        %614 = vxpose.xlu0.b32.cont [6/16] 0.0, 128
        %615 = vxpose.xlu0.b32.cont [7/16] 0.0, 128
        %616 = vxpose.xlu0.b32.cont [8/16] 0.0, 128
        %617 = vxpose.xlu0.b32.cont [9/16] 0.0, 128
        %618 = vxpose.xlu0.b32.cont [10/16] 0.0, 128
        %619 = vxpose.xlu0.b32.cont [11/16] 0.0, 128
        %620 = vxpose.xlu0.b32.cont [12/16] 0.0, 128
        %621 = vxpose.xlu0.b32.cont [13/16] 0.0, 128
        %622 = vxpose.xlu0.b32.cont [14/16] 0.0, 128
        %623 = vxpose.xlu0.b32.cont [15/16] 0.0, 128
        %624 = vxpose.xlu0.b32.end [16/16] 0.0, 128
        %v625 = vpop.trf.xlu0
        %v626 = vpop.trf.xlu0
        %v627 = vpop.trf.xlu0
        %v628 = vpop.trf.xlu0
        %v629 = vpop.trf.xlu0
        %v630 = vpop.trf.xlu0
        %v631 = vpop.trf.xlu0
        %v632 = vpop.trf.xlu0
        %v633 = vpop.trf.xlu0
        %v634 = vpop.trf.xlu0
        %v635 = vpop.trf.xlu0
        %v636 = vpop.trf.xlu0
        %v637 = vpop.trf.xlu0
        %v638 = vpop.trf.xlu0
        %v639 = vpop.trf.xlu0
        %v640 = vpop.trf.xlu0
        %641 = vxpose.xlu0.b32.start [1/16] %v559, 128
        %642 = vxpose.xlu0.b32.cont [2/16] %v564, 128
        %643 = vxpose.xlu0.b32.cont [3/16] 0.0, 128
        %644 = vxpose.xlu0.b32.cont [4/16] 0.0, 128
        %645 = vxpose.xlu0.b32.cont [5/16] 0.0, 128
        %646 = vxpose.xlu0.b32.cont [6/16] 0.0, 128
        %647 = vxpose.xlu0.b32.cont [7/16] 0.0, 128
        %648 = vxpose.xlu0.b32.cont [8/16] 0.0, 128
        %649 = vxpose.xlu0.b32.cont [9/16] 0.0, 128
        %650 = vxpose.xlu0.b32.cont [10/16] 0.0, 128
        %651 = vxpose.xlu0.b32.cont [11/16] 0.0, 128
        %652 = vxpose.xlu0.b32.cont [12/16] 0.0, 128
        %653 = vxpose.xlu0.b32.cont [13/16] 0.0, 128
        %654 = vxpose.xlu0.b32.cont [14/16] 0.0, 128
        %655 = vxpose.xlu0.b32.cont [15/16] 0.0, 128
        %656 = vxpose.xlu0.b32.end [16/16] 0.0, 128
        %v657 = vpop.trf.xlu0
        %v658 = vpop.trf.xlu0
        %v659 = vpop.trf.xlu0
        %v660 = vpop.trf.xlu0
        %v661 = vpop.trf.xlu0
        %v662 = vpop.trf.xlu0
        %v663 = vpop.trf.xlu0
        %v664 = vpop.trf.xlu0
        %v665 = vpop.trf.xlu0
        %v666 = vpop.trf.xlu0
        %v667 = vpop.trf.xlu0
        %v668 = vpop.trf.xlu0
        %v669 = vpop.trf.xlu0
        %v670 = vpop.trf.xlu0
        %v671 = vpop.trf.xlu0
        %v672 = vpop.trf.xlu0
        %673 = vxpose.xlu0.b32.start [1/16] %v569, 128
        %674 = vxpose.xlu0.b32.cont [2/16] %v574, 128
        %675 = vxpose.xlu0.b32.cont [3/16] 0.0, 128
        %676 = vxpose.xlu0.b32.cont [4/16] 0.0, 128
        %677 = vxpose.xlu0.b32.cont [5/16] 0.0, 128
        %678 = vxpose.xlu0.b32.cont [6/16] 0.0, 128
        %679 = vxpose.xlu0.b32.cont [7/16] 0.0, 128
        %680 = vxpose.xlu0.b32.cont [8/16] 0.0, 128
        %681 = vxpose.xlu0.b32.cont [9/16] 0.0, 128
        %682 = vxpose.xlu0.b32.cont [10/16] 0.0, 128
        %683 = vxpose.xlu0.b32.cont [11/16] 0.0, 128
        %684 = vxpose.xlu0.b32.cont [12/16] 0.0, 128
        %685 = vxpose.xlu0.b32.cont [13/16] 0.0, 128
        %686 = vxpose.xlu0.b32.cont [14/16] 0.0, 128
        %687 = vxpose.xlu0.b32.cont [15/16] 0.0, 128
        %688 = vxpose.xlu0.b32.end [16/16] 0.0, 128
        %v689 = vpop.trf.xlu0
        %v690 = vpop.trf.xlu0
        %v691 = vpop.trf.xlu0
        %v692 = vpop.trf.xlu0
        %v693 = vpop.trf.xlu0
        %v694 = vpop.trf.xlu0
        %v695 = vpop.trf.xlu0
        %v696 = vpop.trf.xlu0
        %v697 = vpop.trf.xlu0
        %v698 = vpop.trf.xlu0
        %v699 = vpop.trf.xlu0
        %v700 = vpop.trf.xlu0
        %v701 = vpop.trf.xlu0
        %v702 = vpop.trf.xlu0
        %v703 = vpop.trf.xlu0
        %v704 = vpop.trf.xlu0
        %vm705 = vcmask 130048
        %706 = vst.msk [vmem:[%s206] sm:$0xff] %vm705, %v593
        %707 = vst.msk [vmem:[%s206 + $0x8] sm:$0xff] %vm705, %v594
        %708 = vst.msk [vmem:[%s206 + $0x10] sm:$0xff] %vm705, %v625
        %709 = vst.msk [vmem:[%s206 + $0x18] sm:$0xff] %vm705, %v626
        %710 = vst.msk [vmem:[%s206 + $0x20] sm:$0xff] %vm705, %v657
        %711 = vst.msk [vmem:[%s206 + $0x28] sm:$0xff] %vm705, %v658
        %712 = vst.msk [vmem:[%s206 + $0x30] sm:$0xff] %vm705, %v689
        %713 = vst.msk [vmem:[%s206 + $0x38] sm:$0xff] %vm705, %v690
        %s714 = sand.u32 %s112, 1
        %s715 = scalar_lea.sflag [#allocation4], %s714
        %s716 = sand.u32 %s112, 1
        %s717 = smul.addr %s716, 64
        %s718 = scalar_lea.vmem [#allocation5], %s717
        // Predicated region
        $region37: #{tpu_custom_call.1} parent=31 // pred_check
          %p719 = pneg %p122
        $region38: #{tpu_custom_call.1} parent=31 // pred_check_branch
          %721 = sbr.rel (%p719) target = $region40
        $region39: #{tpu_custom_call.1} parent=31 // pred_region
          %s722 = smul.u32 4, %s25
          %s724 = ssub.s32 1024, 1024
          %725 = vsyncadd %s715, %s724
          %s726 = smul.addr %s722, 2
          %s727 = smul.addr %s24, 8
          %s728 = sadd.s32 %s726, %s727
          %s729 = smul.addr %s728, 128
          %s730 = scalar_lea.hbm %s3, %s729
          %s731 = sshll.u32 %s718, 4
          %s732 = int_to_ptr.vmem [resolvable:$true] %s731
          %737 = dma.vmem_to_hbm [thread:$0]  %s732, 1024, %s730, %s715, 128, 128, 8
        $region40: #{tpu_custom_call.1} parent=31 // pred_fallthru
          _
      $region32: #{tpu_custom_call.1} parent=5 // pred_fallthru
        _
      %p738 = scmp.le.s32.totalorder 2, %s15
      // Predicated region
      $region41: #{tpu_custom_call.1} parent=5 // pred_check
        %p739 = pneg %p738
      $region42: #{tpu_custom_call.1} parent=5 // pred_check_branch
        %741 = sbr.rel (%p739) target = $region44
      $region43: #{tpu_custom_call.1} parent=5 // pred_region
        %s742 = ssub.s32 %s15, 2
        // Predicated region
        $region45: #{tpu_custom_call.1} parent=43 // pred_check
          %p743 = pneg %p128
        $region46: #{tpu_custom_call.1} parent=43 // pred_check_branch
          %745 = sbr.rel (%p743) target = $region48
        $region47: #{tpu_custom_call.1} parent=43 // pred_region
          %s746 = sand.u32 %s113, 1
          %s747 = scalar_lea.sflag [#allocation4], %s746
          %s748 = sand.u32 %s113, 1
          %s749 = smul.addr %s748, 64
          %s750 = scalar_lea.vmem [#allocation5], %s749
          %751 = dma.done %s747, 1024
        $region48: #{tpu_custom_call.1} parent=43 // pred_fallthru
          _
      $region44: #{tpu_custom_call.1} parent=5 // pred_fallthru
        _
    $region6: #{tpu_custom_call.1} parent=1 // loop_footer
      %s19 = sadd.s32 1, %s15
    $region7: #{tpu_custom_call.1} parent=1 // loop_footer_branch
      %14 = sbr.rel target = $region3
    $region8: #{tpu_custom_call.1} parent=1 // loop_exit
      _
    %752 = vsyncpa [#allocation3], 1
    %s753 = scalar_lea.sflag [#allocation3], 1
    %754 = vsyncpa %s753, 1
    %755 = vsyncpa [#allocation4], 1
    %s756 = scalar_lea.sflag [#allocation4], 1
    %757 = vsyncpa %s756, 1

</llo_original>
